<compile_context>
chip_gen: v7x
topology: tpu7x:2x2x1
jax: 0.10.0
libtpu: 0.0.40
codegen_flags: <defaults>
</compile_context>

<pallas_src>
import functools

import jax
import jax.numpy as jnp
from jax.experimental import pallas as pl
from jax.experimental.pallas import tpu as pltpu


def _att_output_kernel(x_ref, w_ref, b_ref, res_ref, gamma_ref, beta_ref, o_ref,
                       *, true_h: int, eps: float):
    # x_ref:      (TM, Hp) hidden_states tile (native dtype, lane-padded)
    # w_ref:      (Hp, Hp) nn.Linear weight, [out, in] layout (native dtype)
    # b_ref:      (1, Hp)  dense bias (f32)
    # res_ref:    (TM, Hp) residual tile (native dtype)
    # gamma/beta: (1, Hp)  LayerNorm params (f32)
    hp = x_ref.shape[-1]

    # Dense: y = x @ W^T  -> contract x dim 1 with w dim 1 on the MXU,
    # f32 accumulation, no pre-matmul up-cast of the operands.
    y = jax.lax.dot_general(
        x_ref[...],
        w_ref[...],
        dimension_numbers=(((1,), (1,)), ((), ())),
        preferred_element_type=jnp.float32,
    )
    y = y + b_ref[...]

    # Residual add + LayerNorm (f32 math, eps=1e-12, biased variance over the
    # TRUE feature count).  Padded lanes of x/w/b/res are zero, so they add
    # nothing to the row sums; they only need to be masked out of the
    # variance (where centered == -mean).
    y = y + res_ref[...].astype(jnp.float32)
    inv_h = 1.0 / float(true_h)
    mean = jnp.sum(y, axis=-1, keepdims=True) * inv_h
    centered = y - mean
    if hp != true_h:
        lane_ids = jax.lax.broadcasted_iota(jnp.int32, (1, hp), 1)
        lane_mask = lane_ids < true_h
        centered_sq = jnp.where(lane_mask, centered, 0.0)
    else:
        centered_sq = centered
    var = jnp.sum(centered_sq * centered_sq, axis=-1, keepdims=True) * inv_h
    inv = jax.lax.rsqrt(var + eps)
    # Padded lanes get gamma=beta=0 -> 0 output; they are sliced off outside.
    out = centered * inv * gamma_ref[...] + beta_ref[...]
    o_ref[...] = out.astype(o_ref.dtype)


def _resident_spec(shape):
    """Constant-index block (weight / bias / gamma / beta): resident in VMEM
    across all grid steps; single-buffered so the pipeline does not allocate
    a useless second buffer."""
    try:
        return pl.BlockSpec(shape, lambda i: (0, 0), pipeline_mode=pl.Buffered(1))
    except TypeError:  # older jax without the pipeline_mode kwarg
        return pl.BlockSpec(shape, lambda i: (0, 0))


def att_output(hidden_states, input_tensor, w, b, gamma, beta,
               *, eps=1e-12, block_m=512, donate_hidden_states=False):
    """hidden_states, input_tensor: [B, S, H].  w: [H, H] (out, in) like nn.Linear."""
    B, S, H = hidden_states.shape
    M = B * S

    x2d = hidden_states.reshape(M, H)
    r2d = input_tensor.reshape(M, H)
    b2d = b.reshape(1, H).astype(jnp.float32)
    g2d = gamma.reshape(1, H).astype(jnp.float32)
    be2d = beta.reshape(1, H).astype(jnp.float32)
    w2d = w

    # Lane-pad the feature axis to a multiple of 128 so stores are lane-dense
    # and the MXU sees full-width operands.  Zero padding keeps the matmul,
    # bias, residual and LayerNorm sums exact.
    h_pad = pl.cdiv(H, 128) * 128
    if h_pad != H:
        dp = h_pad - H
        x2d = jnp.pad(x2d, ((0, 0), (0, dp)))
        r2d = jnp.pad(r2d, ((0, 0), (0, dp)))
        w2d = jnp.pad(w2d, ((0, dp), (0, dp)))
        b2d = jnp.pad(b2d, ((0, 0), (0, dp)))
        g2d = jnp.pad(g2d, ((0, 0), (0, dp)))
        be2d = jnp.pad(be2d, ((0, 0), (0, dp)))

    # Row-tile size: as large as the VMEM budget comfortably allows (block_m),
    # clamped to M; must be a multiple of 8 unless it covers the whole M dim.
    tm = min(block_m, M)
    if tm < M:
        tm = max(8, (tm // 8) * 8)
    m_pad = pl.cdiv(M, tm) * tm
    if m_pad != M:
        pad = m_pad - M
        x2d = jnp.pad(x2d, ((0, pad), (0, 0)))
        r2d = jnp.pad(r2d, ((0, pad), (0, 0)))

    extra = {}
    if donate_hidden_states and m_pad == M and h_pad == H:
        # Output tile i is only written after x tile i is consumed -> safe alias.
        extra["input_output_aliases"] = {0: 0}

    kernel = functools.partial(_att_output_kernel, true_h=H, eps=float(eps))

    out2d = pl.pallas_call(
        kernel,
        out_shape=jax.ShapeDtypeStruct((m_pad, h_pad), hidden_states.dtype),
        grid_spec=pltpu.PrefetchScalarGridSpec(
            num_scalar_prefetch=0,
            grid=(m_pad // tm,),
            in_specs=[
                pl.BlockSpec((tm, h_pad), lambda i: (i, 0)),   # hidden_states tile
                _resident_spec((h_pad, h_pad)),                # dense weight [out, in]
                _resident_spec((1, h_pad)),                    # dense bias
                pl.BlockSpec((tm, h_pad), lambda i: (i, 0)),   # residual tile
                _resident_spec((1, h_pad)),                    # LayerNorm gamma
                _resident_spec((1, h_pad)),                    # LayerNorm beta
            ],
            out_specs=pl.BlockSpec((tm, h_pad), lambda i: (i, 0)),
        ),
        compiler_params=pltpu.CompilerParams(
            dimension_semantics=("parallel",),   # row tiles are independent -> megacore on v7x
            vmem_limit_bytes=64 * 1024 * 1024,
        ),
        **extra,
    )(x2d, w2d, b2d, r2d, g2d, be2d)

    if m_pad != M:
        out2d = out2d[:M]
    if h_pad != H:
        out2d = out2d[:, :H]
    return out2d.reshape(B, S, H)


if __name__ == "__main__":
    # config.cross_hidden_size = 32; dropout prob irrelevant in eval mode.
    B, S, H = 2, 8, 32

    key = jax.random.PRNGKey(0)
    k_x, k_r, k_w, k_b = jax.random.split(key, 4)

    hidden_states = jax.random.normal(k_x, (B, S, H), dtype=jnp.float32)
    input_tensor = jax.random.normal(k_r, (B, S, H), dtype=jnp.float32)

    # Deterministic parameter init (synthetic, not a checkpoint load).
    w = jax.random.normal(k_w, (H, H), dtype=jnp.float32) * 0.02  # nn.Linear weight [out, in]
    b = jax.random.normal(k_b, (H,), dtype=jnp.float32) * 0.02    # nn.Linear bias
    gamma = jnp.ones((H,), dtype=jnp.float32)                     # LayerNorm weight
    beta = jnp.zeros((H,), dtype=jnp.float32)                     # LayerNorm bias

    out = att_output(hidden_states, input_tensor, w, b, gamma, beta)
    out = jax.block_until_ready(out)

    # Pure-JAX reference.
    y_ref = hidden_states @ w.T + b
    y_ref = y_ref + input_tensor
    mu = jnp.mean(y_ref, axis=-1, keepdims=True)
    var = jnp.mean((y_ref - mu) ** 2, axis=-1, keepdims=True)
    ref = (y_ref - mu) / jnp.sqrt(var + 1e-12) * gamma + beta

    assert out.shape == (B, S, H)
    err = jnp.max(jnp.abs(out - ref))
    assert err < 1e-4, err

    print("KERNEL_OK")
</pallas_src>

<mosaic_0001>
module attributes {stable_mosaic.version = 11 : i64} {
  func.func @_att_output_kernel(%arg0: i32, %arg1: memref<16x128xf32, #tpu.memory_space<vmem>>, %arg2: memref<128x128xf32, #tpu.memory_space<vmem>>, %arg3: memref<1x128xf32, #tpu.memory_space<vmem>>, %arg4: memref<16x128xf32, #tpu.memory_space<vmem>>, %arg5: memref<1x128xf32, #tpu.memory_space<vmem>>, %arg6: memref<1x128xf32, #tpu.memory_space<vmem>>, %arg7: memref<16x128xf32, #tpu.memory_space<vmem>>) attributes {dimension_semantics = [#tpu.dimension_semantics<parallel>], iteration_bounds = array<i64: 1>, scalar_prefetch = 0 : i64, scratch_operands = 0 : i64, tpu.core_type = #tpu.core_type<tc>, window_params = [{transform_indices = @transform_0, window_bounds = array<i64: 16, 128>}, {pipeline_mode = #tpu.pipeline_mode<synchronous>, transform_indices = @transform_1, window_bounds = array<i64: 128, 128>}, {pipeline_mode = #tpu.pipeline_mode<synchronous>, transform_indices = @transform_2, window_bounds = array<i64: 1, 128>}, {transform_indices = @transform_3, window_bounds = array<i64: 16, 128>}, {pipeline_mode = #tpu.pipeline_mode<synchronous>, transform_indices = @transform_4, window_bounds = array<i64: 1, 128>}, {pipeline_mode = #tpu.pipeline_mode<synchronous>, transform_indices = @transform_5, window_bounds = array<i64: 1, 128>}, {transform_indices = @transform_6, window_bounds = array<i64: 16, 128>}]} {
    %c0 = arith.constant 0 : index
    %c0_0 = arith.constant 0 : index
    %0 = vector.load %arg1[%c0, %c0_0] : memref<16x128xf32, #tpu.memory_space<vmem>>, vector<16x128xf32>
    %c0_1 = arith.constant 0 : index
    %c0_2 = arith.constant 0 : index
    %1 = vector.load %arg2[%c0_1, %c0_2] : memref<128x128xf32, #tpu.memory_space<vmem>>, vector<128x128xf32>
    %cst = arith.constant dense<0.000000e+00> : vector<16x128xf32>
    %2 = tpu.matmul %0, %1, %cst {dimension_numbers = #tpu.dot_dimension_numbers<[1], [1], [0], [0], [0, 0, 1, 0], [], []>} : vector<16x128xf32>, vector<128x128xf32>, vector<16x128xf32> -> vector<16x128xf32>
    %c0_3 = arith.constant 0 : index
    %c0_4 = arith.constant 0 : index
    %3 = vector.load %arg3[%c0_3, %c0_4] : memref<1x128xf32, #tpu.memory_space<vmem>>, vector<1x128xf32>
    %4 = vector.broadcast %3 : vector<1x128xf32> to vector<16x128xf32>
    %5 = arith.addf %2, %4 : vector<16x128xf32>
    %c0_5 = arith.constant 0 : index
    %c0_6 = arith.constant 0 : index
    %6 = vector.load %arg4[%c0_5, %c0_6] : memref<16x128xf32, #tpu.memory_space<vmem>>, vector<16x128xf32>
    %7 = arith.addf %5, %6 : vector<16x128xf32>
    %cst_7 = arith.constant dense<0.000000e+00> : vector<16xf32>
    %8 = vector.multi_reduction <add>, %7, %cst_7 [1] : vector<16x128xf32> to vector<16xf32>
    %9 = vector.shape_cast %8 : vector<16xf32> to vector<16x1xf32>
    %cst_8 = arith.constant 3.125000e-02 : f32
    %10 = vector.broadcast %cst_8 : f32 to vector<16x1xf32>
    %11 = arith.mulf %9, %10 : vector<16x1xf32>
    %12 = vector.broadcast %11 : vector<16x1xf32> to vector<16x128xf32>
    %13 = arith.subf %7, %12 : vector<16x128xf32>
    %14 = tpu.iota {dimensions = array<i32: 1>} : vector<1x128xi32>
    %c32_i32 = arith.constant 32 : i32
    %15 = vector.broadcast %c32_i32 : i32 to vector<1x128xi32>
    %16 = arith.cmpi slt, %14, %15 : vector<1x128xi32>
    %cst_9 = arith.constant 0.000000e+00 : f32
    %17 = vector.shape_cast %16 : vector<1x128xi1> to vector<1x128xi1>
    %18 = vector.broadcast %17 : vector<1x128xi1> to vector<16x128xi1>
    %19 = vector.broadcast %cst_9 : f32 to vector<16x128xf32>
    %20 = arith.select %18, %13, %19 : vector<16x128xi1>, vector<16x128xf32>
    %21 = arith.mulf %20, %20 : vector<16x128xf32>
    %cst_10 = arith.constant dense<0.000000e+00> : vector<16xf32>
    %22 = vector.multi_reduction <add>, %21, %cst_10 [1] : vector<16x128xf32> to vector<16xf32>
    %23 = vector.shape_cast %22 : vector<16xf32> to vector<16x1xf32>
    %cst_11 = arith.constant 3.125000e-02 : f32
    %24 = vector.broadcast %cst_11 : f32 to vector<16x1xf32>
    %25 = arith.mulf %23, %24 : vector<16x1xf32>
    %cst_12 = arith.constant 9.99999996E-13 : f32
    %26 = vector.broadcast %cst_12 : f32 to vector<16x1xf32>
    %27 = arith.addf %25, %26 : vector<16x1xf32>
    %28 = math.rsqrt %27 : vector<16x1xf32>
    %29 = vector.broadcast %28 : vector<16x1xf32> to vector<16x128xf32>
    %30 = arith.mulf %13, %29 : vector<16x128xf32>
    %c0_13 = arith.constant 0 : index
    %c0_14 = arith.constant 0 : index
    %31 = vector.load %arg5[%c0_13, %c0_14] : memref<1x128xf32, #tpu.memory_space<vmem>>, vector<1x128xf32>
    %32 = vector.broadcast %31 : vector<1x128xf32> to vector<16x128xf32>
    %33 = arith.mulf %30, %32 : vector<16x128xf32>
    %c0_15 = arith.constant 0 : index
    %c0_16 = arith.constant 0 : index
    %34 = vector.load %arg6[%c0_15, %c0_16] : memref<1x128xf32, #tpu.memory_space<vmem>>, vector<1x128xf32>
    %35 = vector.broadcast %34 : vector<1x128xf32> to vector<16x128xf32>
    %36 = arith.addf %33, %35 : vector<16x128xf32>
    %c0_17 = arith.constant 0 : index
    %c0_18 = arith.constant 0 : index
    %37 = vector.load %arg7[%c0_17, %c0_18] : memref<16x128xf32, #tpu.memory_space<vmem>>, vector<16x128xf32>
    tpu.vector_store %arg7[%c0_17, %c0_18], %36 {strides = array<i32>} : memref<16x128xf32, #tpu.memory_space<vmem>>, vector<16x128xf32>,
    return
  }
  func.func @transform_0(%arg0: i32) -> (i32, i32) {
    %c0_i32 = arith.constant 0 : i32
    %c0_i32_0 = arith.constant 0 : i32
    return %arg0, %c0_i32 : i32, i32
  }
  func.func @transform_1(%arg0: i32) -> (i32, i32) {
    %c0_i32 = arith.constant 0 : i32
    %c0_i32_0 = arith.constant 0 : i32
    %c0_i32_1 = arith.constant 0 : i32
    return %c0_i32, %c0_i32_0 : i32, i32
  }
  func.func @transform_2(%arg0: i32) -> (i32, i32) {
    %c0_i32 = arith.constant 0 : i32
    %c0_i32_0 = arith.constant 0 : i32
    %c0_i32_1 = arith.constant 0 : i32
    return %c0_i32, %c0_i32_0 : i32, i32
  }
  func.func @transform_3(%arg0: i32) -> (i32, i32) {
    %c0_i32 = arith.constant 0 : i32
    %c0_i32_0 = arith.constant 0 : i32
    return %arg0, %c0_i32 : i32, i32
  }
  func.func @transform_4(%arg0: i32) -> (i32, i32) {
    %c0_i32 = arith.constant 0 : i32
    %c0_i32_0 = arith.constant 0 : i32
    %c0_i32_1 = arith.constant 0 : i32
    return %c0_i32, %c0_i32_0 : i32, i32
  }
  func.func @transform_5(%arg0: i32) -> (i32, i32) {
    %c0_i32 = arith.constant 0 : i32
    %c0_i32_0 = arith.constant 0 : i32
    %c0_i32_1 = arith.constant 0 : i32
    return %c0_i32, %c0_i32_0 : i32, i32
  }
  func.func @transform_6(%arg0: i32) -> (i32, i32) {
    %c0_i32 = arith.constant 0 : i32
    %c0_i32_0 = arith.constant 0 : i32
    return %arg0, %c0_i32 : i32, i32
  }
}

</mosaic_0001>

<llo_original>
// kernel: tpu_custom_call.1
$region0: #{tpu_custom_call.1}
  #allocation0 [shape = 'u32[]', space=smem, size = 0x4, offset = 0x4, fixed_abs, tag = 'smem constant byte address 0x4 - core index']
  #allocation1 [shape = 'u32[144,128]{1,0:T(1,128)}', space=vmem, size = 0x12000, scoped, tag = 'internal scratch']
  %s0 = inlined_call_operand.hbm [shape: f32[16,128], index: 0, kind: input, shape index: {}]
  %s1 = inlined_call_operand.hbm [shape: f32[128,128], index: 1, kind: input, shape index: {}]
  %s2 = inlined_call_operand.hbm [shape: f32[1,128], index: 2, kind: input, shape index: {}]
  %s3 = inlined_call_operand.hbm [shape: f32[16,128], index: 3, kind: input, shape index: {}]
  %s4 = inlined_call_operand.hbm [shape: f32[1,128], index: 4, kind: input, shape index: {}]
  %s5 = inlined_call_operand.hbm [shape: f32[1,128], index: 5, kind: input, shape index: {}]
  %s6 = inlined_call_operand.hbm [shape: f32[16,128], index: 6, kind: output, shape index: {}]
  %s7 = sld [smem:[#allocation0]]
  $region58: #{tpu_custom_call.1} parent=0
    _
  %s9 = ssub.s32 1, %s7
  %s10 = scalar_select 0, %s9, %s7
  $region1: #{tpu_custom_call.1} parent=0
    #allocation2 [shape = 'u8[8192]{0}', space=vmem, size = 0x2000, scoped, tag = 'input window, operand 0, single buffered']
    #allocation3 [shape = 's32[1]{0}', space=sflag, size = 0x4, scoped, tag = 'scoped memory for tpu_custom_call.1']
    #allocation4 [shape = 's32[1]{0}', space=sflag, size = 0x4, scoped, tag = 'scoped memory for tpu_custom_call.1']
    #allocation5 [shape = 'u8[65536]{0}', space=vmem, size = 0x10000, scoped, tag = 'input window, operand 1, single buffered']
    #allocation6 [shape = 's32[1]{0}', space=sflag, size = 0x4, scoped, tag = 'scoped memory for tpu_custom_call.1']
    #allocation7 [shape = 'u8[512]{0}', space=vmem, size = 0x400, scoped, tag = 'input window, operand 2, single buffered']
    #allocation8 [shape = 'u8[8192]{0}', space=vmem, size = 0x2000, scoped, tag = 'input window, operand 3, single buffered']
    #allocation9 [shape = 's32[1]{0}', space=sflag, size = 0x4, scoped, tag = 'scoped memory for tpu_custom_call.1']
    #allocation10 [shape = 'u8[512]{0}', space=vmem, size = 0x400, scoped, tag = 'input window, operand 4, single buffered']
    #allocation11 [shape = 'u8[512]{0}', space=vmem, size = 0x400, scoped, tag = 'input window, operand 5, single buffered']
    #allocation12 [shape = 's32[1]{0}', space=sflag, size = 0x4, scoped, tag = 'scoped memory for tpu_custom_call.1']
    #allocation13 [shape = 'u8[8192]{0}', space=vmem, size = 0x2000, scoped, tag = 'output window, operand 0, single buffered']
    %11 = vsyncpa [#allocation3], 0
    %12 = vsyncpa [#allocation6], 0
    %13 = vsyncpa [#allocation9], 0
    %14 = vsyncpa [#allocation12], 0
    %15 = vsyncpa [#allocation4], 0
    // Predicated region
    $region2: #{tpu_custom_call.1} parent=1 // pred_check
      _
    $region3: #{tpu_custom_call.1} parent=1 // pred_check_branch
      %17 = sbr.rel (0) target = $region5
    $region4: #{tpu_custom_call.1} parent=1 // pred_region
      %s19 = ssub.s32 256, 256
      %20 = vsyncadd [#allocation3], %s19
      %s21 = sshll.u32 [#allocation2], 4
      %s22 = int_to_ptr.vmem [resolvable:$true] %s21
      %27 = dma.hbm_to_vmem [thread:$0]  %s0, 256, %s22, [#allocation3], 128, 128, 8
    $region5: #{tpu_custom_call.1} parent=1 // pred_fallthru
      _
    // Predicated region
    $region6: #{tpu_custom_call.1} parent=1 // pred_check
      _
    $region7: #{tpu_custom_call.1} parent=1 // pred_check_branch
      %29 = sbr.rel (0) target = $region9
    $region8: #{tpu_custom_call.1} parent=1 // pred_region
      %s31 = ssub.s32 2048, 2048
      %32 = vsyncadd [#allocation6], %s31
      %s33 = sshll.u32 [#allocation5], 4
      %s34 = int_to_ptr.vmem [resolvable:$true] %s33
      %39 = dma.hbm_to_vmem [thread:$0]  %s1, 2048, %s34, [#allocation6], 128, 128, 8
    $region9: #{tpu_custom_call.1} parent=1 // pred_fallthru
      _
    // Predicated region
    $region10: #{tpu_custom_call.1} parent=1 // pred_check
      _
    $region11: #{tpu_custom_call.1} parent=1 // pred_check_branch
      %41 = sbr.rel (0) target = $region13
    $region12: #{tpu_custom_call.1} parent=1 // pred_region
      %s43 = ssub.s32 16, 16
      %44 = vsyncadd [#allocation6], %s43
      %s46 = sshll.u32 [#allocation7], 4
      %s47 = int_to_ptr.vmem [resolvable:$true] %s46
      %49 = dma.hbm_to_vmem [thread:$0]  %s2, 16, %s47, [#allocation6]
    $region13: #{tpu_custom_call.1} parent=1 // pred_fallthru
      _
    // Predicated region
    $region14: #{tpu_custom_call.1} parent=1 // pred_check
      _
    $region15: #{tpu_custom_call.1} parent=1 // pred_check_branch
      %51 = sbr.rel (0) target = $region17
    $region16: #{tpu_custom_call.1} parent=1 // pred_region
      %s53 = ssub.s32 256, 256
      %54 = vsyncadd [#allocation9], %s53
      %s55 = sshll.u32 [#allocation8], 4
      %s56 = int_to_ptr.vmem [resolvable:$true] %s55
      %61 = dma.hbm_to_vmem [thread:$0]  %s3, 256, %s56, [#allocation9], 128, 128, 8
    $region17: #{tpu_custom_call.1} parent=1 // pred_fallthru
      _
    // Predicated region
    $region18: #{tpu_custom_call.1} parent=1 // pred_check
      _
    $region19: #{tpu_custom_call.1} parent=1 // pred_check_branch
      %63 = sbr.rel (0) target = $region21
    $region20: #{tpu_custom_call.1} parent=1 // pred_region
      %s65 = ssub.s32 16, 16
      %66 = vsyncadd [#allocation9], %s65
      %s68 = sshll.u32 [#allocation10], 4
      %s69 = int_to_ptr.vmem [resolvable:$true] %s68
      %71 = dma.hbm_to_vmem [thread:$0]  %s4, 16, %s69, [#allocation9]
    $region21: #{tpu_custom_call.1} parent=1 // pred_fallthru
      _
    // Predicated region
    $region22: #{tpu_custom_call.1} parent=1 // pred_check
      _
    $region23: #{tpu_custom_call.1} parent=1 // pred_check_branch
      %73 = sbr.rel (0) target = $region25
    $region24: #{tpu_custom_call.1} parent=1 // pred_region
      %s75 = ssub.s32 16, 16
      %76 = vsyncadd [#allocation12], %s75
      %s78 = sshll.u32 [#allocation11], 4
      %s79 = int_to_ptr.vmem [resolvable:$true] %s78
      %81 = dma.hbm_to_vmem [thread:$0]  %s5, 16, %s79, [#allocation12]
    $region25: #{tpu_custom_call.1} parent=1 // pred_fallthru
      _
    // Predicated region
    $region26: #{tpu_custom_call.1} parent=1 // pred_check
      _
    $region27: #{tpu_custom_call.1} parent=1 // pred_check_branch
      %83 = sbr.rel (0) target = $region29
    $region28: #{tpu_custom_call.1} parent=1 // pred_region
      %84 = dma.done [#allocation3], 256
    $region29: #{tpu_custom_call.1} parent=1 // pred_fallthru
      _
    // Predicated region
    $region30: #{tpu_custom_call.1} parent=1 // pred_check
      _
    $region31: #{tpu_custom_call.1} parent=1 // pred_check_branch
      %86 = sbr.rel (0) target = $region33
    $region32: #{tpu_custom_call.1} parent=1 // pred_region
      %87 = dma.done [#allocation6], 2048
    $region33: #{tpu_custom_call.1} parent=1 // pred_fallthru
      _
    // Predicated region
    $region34: #{tpu_custom_call.1} parent=1 // pred_check
      _
    $region35: #{tpu_custom_call.1} parent=1 // pred_check_branch
      %89 = sbr.rel (0) target = $region37
    $region36: #{tpu_custom_call.1} parent=1 // pred_region
      %90 = dma.done [#allocation6], 16
    $region37: #{tpu_custom_call.1} parent=1 // pred_fallthru
      _
    // Predicated region
    $region38: #{tpu_custom_call.1} parent=1 // pred_check
      _
    $region39: #{tpu_custom_call.1} parent=1 // pred_check_branch
      %92 = sbr.rel (0) target = $region41
    $region40: #{tpu_custom_call.1} parent=1 // pred_region
      %93 = dma.done [#allocation9], 256
    $region41: #{tpu_custom_call.1} parent=1 // pred_fallthru
      _
    // Predicated region
    $region42: #{tpu_custom_call.1} parent=1 // pred_check
      _
    $region43: #{tpu_custom_call.1} parent=1 // pred_check_branch
      %95 = sbr.rel (0) target = $region45
    $region44: #{tpu_custom_call.1} parent=1 // pred_region
      %96 = dma.done [#allocation9], 16
    $region45: #{tpu_custom_call.1} parent=1 // pred_fallthru
      _
    // Predicated region
    $region46: #{tpu_custom_call.1} parent=1 // pred_check
      _
    $region47: #{tpu_custom_call.1} parent=1 // pred_check_branch
      %98 = sbr.rel (0) target = $region49
    $region48: #{tpu_custom_call.1} parent=1 // pred_region
      %99 = dma.done [#allocation12], 16
    $region49: #{tpu_custom_call.1} parent=1 // pred_fallthru
      _
    %v100 = vld [vmem:[#allocation2] sm:$0xff]
    %v101 = vld [vmem:[#allocation2 + $0x8] sm:$0xff]
    %v102 = vld [vmem:[#allocation5] sm:$0xff]
    %v103 = vld [vmem:[#allocation5 + $0x8] sm:$0xff]
    %v104 = vld [vmem:[#allocation5 + $0x10] sm:$0xff]
    %v105 = vld [vmem:[#allocation5 + $0x18] sm:$0xff]
    %v106 = vld [vmem:[#allocation5 + $0x20] sm:$0xff]
    %v107 = vld [vmem:[#allocation5 + $0x28] sm:$0xff]
    %v108 = vld [vmem:[#allocation5 + $0x30] sm:$0xff]
    %v109 = vld [vmem:[#allocation5 + $0x38] sm:$0xff]
    %v110 = vld [vmem:[#allocation5 + $0x40] sm:$0xff]
    %v111 = vld [vmem:[#allocation5 + $0x48] sm:$0xff]
    %v112 = vld [vmem:[#allocation5 + $0x50] sm:$0xff]
    %v113 = vld [vmem:[#allocation5 + $0x58] sm:$0xff]
    %v114 = vld [vmem:[#allocation5 + $0x60] sm:$0xff]
    %v115 = vld [vmem:[#allocation5 + $0x68] sm:$0xff]
    %v116 = vld [vmem:[#allocation5 + $0x70] sm:$0xff]
    %v117 = vld [vmem:[#allocation5 + $0x78] sm:$0xff]
    %v118 = vld [vmem:[#allocation7] sm:$0x1]
    %v120 = vlaneseq
    %v121 = vshrl.u32 %v120, 7
    %v122 = vsub.s32 0, %v121
    %v123 = vrot.slane %v118, %v122
    %125 = vmatprep.subr.mxu0 0.0
    %126 = vmatpush1.xpose.msra.mxu0 %v102
    %127 = vmatprep.subr.mxu0 0.0
    %128 = vmatpush1.xpose.msra.mxu0 %v103
    %129 = vmatprep.subr.mxu0 0.0
    %130 = vmatpush1.xpose.msra.mxu0 %v104
    %131 = vmatprep.subr.mxu0 0.0
    %132 = vmatpush1.xpose.msra.mxu0 %v105
    %133 = vmatprep.subr.mxu0 0.0
    %134 = vmatpush1.xpose.msra.mxu0 %v106
    %135 = vmatprep.subr.mxu0 0.0
    %136 = vmatpush1.xpose.msra.mxu0 %v107
    %137 = vmatprep.subr.mxu0 0.0
    %138 = vmatpush1.xpose.msra.mxu0 %v108
    %139 = vmatprep.subr.mxu0 0.0
    %140 = vmatpush1.xpose.msra.mxu0 %v109
    %141 = vmatprep.subr.mxu0 0.0
    %142 = vmatpush1.xpose.msra.mxu0 %v110
    %143 = vmatprep.subr.mxu0 0.0
    %144 = vmatpush1.xpose.msra.mxu0 %v111
    %145 = vmatprep.subr.mxu0 0.0
    %146 = vmatpush1.xpose.msra.mxu0 %v112
    %147 = vmatprep.subr.mxu0 0.0
    %148 = vmatpush1.xpose.msra.mxu0 %v113
    %149 = vmatprep.subr.mxu0 0.0
    %150 = vmatpush1.xpose.msra.mxu0 %v114
    %151 = vmatprep.subr.mxu0 0.0
    %152 = vmatpush1.xpose.msra.mxu0 %v115
    %153 = vmatprep.subr.mxu0 0.0
    %154 = vmatpush1.xpose.msra.mxu0 %v116
    %155 = vmatprep.subr.mxu0 0.0
    %156 = vmatpush1.xpose.msra.mxu0 %v117
    %157 = vmatprep.subr.mxu0 0.0
    %158 = vmatpush1.xpose.msra.mxu0 0.0
    %159 = vmatprep.subr.mxu0 0.0
    %160 = vmatpush1.xpose.msra.mxu0 0.0
    %161 = vmatprep.subr.mxu0 0.0
    %162 = vmatpush1.xpose.msra.mxu0 0.0
    %163 = vmatprep.subr.mxu0 0.0
    %164 = vmatpush1.xpose.msra.mxu0 0.0
    %165 = vmatprep.subr.mxu0 0.0
    %166 = vmatpush1.xpose.msra.mxu0 0.0
    %167 = vmatprep.subr.mxu0 0.0
    %168 = vmatpush1.xpose.msra.mxu0 0.0
    %169 = vmatprep.subr.mxu0 0.0
    %170 = vmatpush1.xpose.msra.mxu0 0.0
    %171 = vmatprep.subr.mxu0 0.0
    %172 = vmatpush1.xpose.msra.mxu0 0.0
    %173 = vmatprep.subr.mxu0 0.0
    %174 = vmatpush1.xpose.msra.mxu0 0.0
    %175 = vmatprep.subr.mxu0 0.0
    %176 = vmatpush1.xpose.msra.mxu0 0.0
    %177 = vmatprep.subr.mxu0 0.0
    %178 = vmatpush1.xpose.msra.mxu0 0.0
    %179 = vmatprep.subr.mxu0 0.0
    %180 = vmatpush1.xpose.msra.mxu0 0.0
    %181 = vmatprep.subr.mxu0 0.0
    %182 = vmatpush1.xpose.msra.mxu0 0.0
    %183 = vmatprep.subr.mxu0 0.0
    %184 = vmatpush1.xpose.msra.mxu0 0.0
    %185 = vmatprep.subr.mxu0 0.0
    %186 = vmatpush1.xpose.msra.mxu0 0.0
    %187 = vmatprep.subr.mxu0 0.0
    %188 = vmatpush1.xpose.msra.mxu0 0.0
    %189 = vmatprep.mubr.f32.mxu0 0.0
    %190 = vmatmul.mubr.f32.gmra.mrb[0].mxu0 %v100
    %v191 = vpop.f32.mrb[0].mxu0
    %v192 = vadd.f32 %v123, %v191
    %v193 = vpop.f32.mrb[0].mxu0
    %194 = vmatprep.mubr.f32.mxu0 0.0
    %195 = vmatmul.mubr.f32.gmra.mrb[0].mxu0 %v101
    %v196 = vpop.f32.mrb[0].mxu0
    %v197 = vadd.f32 %v123, %v196
    %v198 = vpop.f32.mrb[0].mxu0
    %199 = vdwg.mxu0
    %v200 = vld [vmem:[#allocation8] sm:$0xff]
    %v201 = vld [vmem:[#allocation8 + $0x8] sm:$0xff]
    %v202 = vadd.f32 %v192, %v200
    %v203 = vadd.f32 %v197, %v201
    %204 = vadd.xlane.f32.xlu0 %v202
    %v205 = vpop.xlane.xlu0 %204
    %206 = vadd.xlane.f32.xlu0 %v203
    %v207 = vpop.xlane.xlu0 %206
    %v208 = vmul.f32 %v205, 0.03125
    %v209 = vmul.f32 %v207, 0.03125
    %v210 = vsub.f32 %v202, %v208
    %v211 = vsub.f32 %v203, %v209
    %v212 = vlaneseq
    %v213 = vand.u32 %v212, 127
    %vm214 = vcmp.lt.s32.totalorder %v213, 32
    %v215 = vsel %vm214, 1, 0
    %vm216 = vcmp.eq.s32.totalorder %v215, 1
    %v217 = vsel %vm216, %v210, 0.0
    %v218 = vsel %vm216, %v211, 0.0
    %v219 = vmul.f32 %v217, %v217
    %v220 = vmul.f32 %v218, %v218
    %221 = vadd.xlane.f32.xlu0 %v219
    %v222 = vpop.xlane.xlu0 %221
    %223 = vadd.xlane.f32.xlu0 %v220
    %v224 = vpop.xlane.xlu0 %223
    %v225 = vmul.f32 %v222, 0.03125
    %v226 = vmul.f32 %v224, 0.03125
    %v227 = vadd.f32 %v225, 1e-12
    %v228 = vadd.f32 %v226, 1e-12
    %v229 = vrsqrt.pop %v227
    %v230 = vrsqrt.pop %v228
    %v231 = vmul.f32 %v210, %v229
    %v232 = vmul.f32 %v211, %v230
    %v233 = vld [vmem:[#allocation10] sm:$0x1]
    %v235 = vlaneseq
    %v236 = vshrl.u32 %v235, 7
    %v237 = vsub.s32 0, %v236
    %v238 = vrot.slane %v233, %v237
    %v240 = vmul.f32 %v231, %v238
    %v241 = vmul.f32 %v232, %v238
    %v242 = vld [vmem:[#allocation11] sm:$0x1]
    %v244 = vlaneseq
    %v245 = vshrl.u32 %v244, 7
    %v246 = vsub.s32 0, %v245
    %v247 = vrot.slane %v242, %v246
    %v249 = vadd.f32 %v240, %v247
    %v250 = vadd.f32 %v241, %v247
    %251 = vst [vmem:[#allocation13] sm:$0xff] %v249
    %252 = vst [vmem:[#allocation13 + $0x8] sm:$0xff] %v250
    // Predicated region
    $region50: #{tpu_custom_call.1} parent=1 // pred_check
      _
    $region51: #{tpu_custom_call.1} parent=1 // pred_check_branch
      %254 = sbr.rel (0) target = $region53
    $region52: #{tpu_custom_call.1} parent=1 // pred_region
      %s256 = ssub.s32 256, 256
      %257 = vsyncadd [#allocation4], %s256
      %s258 = sshll.u32 [#allocation13], 4
      %s259 = int_to_ptr.vmem [resolvable:$true] %s258
      %264 = dma.vmem_to_hbm [thread:$0]  %s259, 256, %s6, [#allocation4], 128, 128, 8
    $region53: #{tpu_custom_call.1} parent=1 // pred_fallthru
      _
    // Predicated region
    $region54: #{tpu_custom_call.1} parent=1 // pred_check
      _
    $region55: #{tpu_custom_call.1} parent=1 // pred_check_branch
      %266 = sbr.rel (0) target = $region57
    $region56: #{tpu_custom_call.1} parent=1 // pred_region
      %267 = dma.done [#allocation4], 256
    $region57: #{tpu_custom_call.1} parent=1 // pred_fallthru
      _
    %268 = vsyncpa [#allocation3], 1
    %269 = vsyncpa [#allocation6], 1
    %270 = vsyncpa [#allocation9], 1
    %271 = vsyncpa [#allocation12], 1
    %272 = vsyncpa [#allocation4], 1

</llo_original>
